<compile_context>
chip_gen: v6e
topology: v6e:2x2x1
jax: 0.10.0
libtpu: 0.0.40
codegen_flags: <defaults>
</compile_context>

<pallas_src>
import jax
import jax.numpy as jnp
from jax.experimental import pallas as pl
from jax.experimental.pallas import tpu as pltpu

IN_FEATURES = 3
OUT_FEATURES = 5

LANE = 128
TILE_M_MAX = 64 * 1024        # lanes per tile: 3*64K*4B + 5*64K*4B ~= 2 MiB/buf
PALLAS_MIN_ROWS = 8 * 1024    # below this, fused XLA is strictly faster


def mlp_kernel(w_ref, b_ref, x_ref, o_ref):
    # w_ref: SMEM (OUT*IN,) f32, row-major flatten of nn.Linear weight [OUT, IN]
    # b_ref: SMEM (OUT,)    f32
    # x_ref: VMEM (IN,  TILE_M) f32   (lane-dense: M on lanes)
    # o_ref: VMEM (OUT, TILE_M) f32
    n_in = x_ref.shape[0]
    n_out = o_ref.shape[0]

    # Load each input feature row once: shape (1, TILE_M).
    xs = [x_ref[i:i + 1, :] for i in range(n_in)]

    # Fully unrolled 15-FMA contraction on the VPU + tanh on the EUP.
    for o in range(n_out):
        acc = xs[0] * w_ref[o * n_in]
        for i in range(1, n_in):
            acc = acc + xs[i] * w_ref[o * n_in + i]
        o_ref[o:o + 1, :] = jnp.tanh(acc + b_ref[o])


def _pallas_forward(x2d, weight, bias):
    """x2d: [M, IN] f32 -> [M, OUT] f32 via lane-dense tiled Pallas kernel."""
    M, IN = x2d.shape
    OUT = weight.shape[0]

    # Pad M up to a lane-aligned multiple of the tile size.
    m_pad = ((M + LANE - 1) // LANE) * LANE
    tile_m = min(TILE_M_MAX, m_pad)
    m_pad = ((m_pad + tile_m - 1) // tile_m) * tile_m
    grid_m = m_pad // tile_m

    # Lane-dense layout: features on sublanes, M on lanes.
    x_t = jnp.pad(x2d.T, ((0, 0), (0, m_pad - M)))      # [IN, m_pad]
    w_flat = weight.reshape(-1)                          # [OUT*IN], w[o,i] at o*IN+i
    b_flat = bias.reshape(-1)                            # [OUT]

    out_t = pl.pallas_call(
        mlp_kernel,
        out_shape=jax.ShapeDtypeStruct((OUT, m_pad), jnp.float32),
        grid_spec=pl.GridSpec(
            grid=(grid_m,),
            in_specs=[
                pl.BlockSpec(memory_space=pltpu.MemorySpace.SMEM),   # weight
                pl.BlockSpec(memory_space=pltpu.MemorySpace.SMEM),   # bias
                pl.BlockSpec((IN, tile_m), lambda i: (0, i)),        # x tile
            ],
            out_specs=pl.BlockSpec((OUT, tile_m), lambda i: (0, i)),
        ),
        compiler_params=pltpu.CompilerParams(
            dimension_semantics=("parallel",),
        ),
        cost_estimate=pl.CostEstimate(
            flops=2 * M * IN * OUT,
            transcendentals=M * OUT,
            bytes_accessed=(M * IN + M * OUT + OUT * IN + OUT) * 4,
        ),
    )(w_flat, b_flat, x_t)

    return out_t[:, :M].T                                # [M, OUT]


def batch_mlp_layer(x, weight, bias, *, force_pallas=False):
    """tanh(x @ weight.T + bias), x: [B, N, IN] -> [B, N, OUT]."""
    B, N, IN = x.shape
    OUT = weight.shape[0]
    assert IN == weight.shape[1]
    M = B * N

    if M < PALLAS_MIN_ROWS and not force_pallas:
        # Tiny problem: let XLA fuse matmul + bias + tanh (launch overhead
        # would dominate the Pallas path).
        return jnp.tanh(jnp.einsum("bni,oi->bno", x, weight) + bias)

    out2d = _pallas_forward(x.reshape(M, IN), weight, bias)
    return out2d.reshape(B, N, OUT)


def init_params(key):
    # nn.Linear(3, 5): weight [5, 3], bias [5], uniform(-1/sqrt(3), 1/sqrt(3)).
    # Deterministic synthetic init (no checkpoint load).
    kw, kb = jax.random.split(key)
    bound = 1.0 / jnp.sqrt(jnp.float32(IN_FEATURES))
    weight = jax.random.uniform(
        kw, (OUT_FEATURES, IN_FEATURES), jnp.float32, -bound, bound)
    bias = jax.random.uniform(
        kb, (OUT_FEATURES,), jnp.float32, -bound, bound)
    return weight, bias


if __name__ == "__main__":
    key = jax.random.PRNGKey(0)
    kx, kp = jax.random.split(key)

    B, N = 2, 8
    x = jax.random.normal(kx, (B, N, IN_FEATURES), dtype=jnp.float32)
    weight, bias = init_params(kp)

    # force_pallas=True so the Pallas kernel itself runs even at this tiny M.
    out = batch_mlp_layer(x, weight, bias, force_pallas=True)
    out = jax.block_until_ready(out)

    # Reference check in plain JAX.
    ref = jnp.tanh(jnp.einsum("bni,oi->bno", x, weight) + bias)
    assert out.shape == (B, N, OUT_FEATURES)
    assert jnp.allclose(out, ref, atol=1e-5, rtol=1e-5)

    print("KERNEL_OK")
</pallas_src>

<mosaic_0001>
module attributes {stable_mosaic.version = 11 : i64} {
  func.func @mlp_kernel(%arg0: i32, %arg1: memref<15xf32, #tpu.memory_space<smem>>, %arg2: memref<5xf32, #tpu.memory_space<smem>>, %arg3: memref<3x128xf32, #tpu.memory_space<vmem>>, %arg4: memref<5x128xf32, #tpu.memory_space<vmem>>) attributes {dimension_semantics = [#tpu.dimension_semantics<parallel>], iteration_bounds = array<i64: 1>, scalar_prefetch = 0 : i64, scratch_operands = 0 : i64, tpu.core_type = #tpu.core_type<tc>, window_params = [{transform_indices = @transform_0, window_bounds = array<i64: 15>}, {transform_indices = @transform_1, window_bounds = array<i64: 5>}, {transform_indices = @transform_2, window_bounds = array<i64: 3, 128>}, {transform_indices = @transform_3, window_bounds = array<i64: 5, 128>}]} {
    %c0 = arith.constant 0 : index
    %c0_0 = arith.constant 0 : index
    %0 = vector.load %arg3[%c0, %c0_0] : memref<3x128xf32, #tpu.memory_space<vmem>>, vector<1x128xf32>
    %c1 = arith.constant 1 : index
    %c0_1 = arith.constant 0 : index
    %1 = vector.load %arg3[%c1, %c0_1] : memref<3x128xf32, #tpu.memory_space<vmem>>, vector<1x128xf32>
    %c2 = arith.constant 2 : index
    %c0_2 = arith.constant 0 : index
    %2 = vector.load %arg3[%c2, %c0_2] : memref<3x128xf32, #tpu.memory_space<vmem>>, vector<1x128xf32>
    %c0_3 = arith.constant 0 : index
    %3 = memref.load %arg1[%c0_3] : memref<15xf32, #tpu.memory_space<smem>>
    %4 = vector.broadcast %3 : f32 to vector<1x128xf32>
    %5 = arith.mulf %0, %4 : vector<1x128xf32>
    %c1_4 = arith.constant 1 : index
    %6 = memref.load %arg1[%c1_4] : memref<15xf32, #tpu.memory_space<smem>>
    %7 = vector.broadcast %6 : f32 to vector<1x128xf32>
    %8 = arith.mulf %1, %7 : vector<1x128xf32>
    %9 = arith.addf %5, %8 : vector<1x128xf32>
    %c2_5 = arith.constant 2 : index
    %10 = memref.load %arg1[%c2_5] : memref<15xf32, #tpu.memory_space<smem>>
    %11 = vector.broadcast %10 : f32 to vector<1x128xf32>
    %12 = arith.mulf %2, %11 : vector<1x128xf32>
    %13 = arith.addf %9, %12 : vector<1x128xf32>
    %c0_6 = arith.constant 0 : index
    %14 = memref.load %arg2[%c0_6] : memref<5xf32, #tpu.memory_space<smem>>
    %15 = vector.broadcast %14 : f32 to vector<1x128xf32>
    %16 = arith.addf %13, %15 : vector<1x128xf32>
    %17 = math.tanh %16 : vector<1x128xf32>
    %c0_7 = arith.constant 0 : index
    %c0_8 = arith.constant 0 : index
    %18 = vector.load %arg4[%c0_7, %c0_8] : memref<5x128xf32, #tpu.memory_space<vmem>>, vector<1x128xf32>
    tpu.vector_store %arg4[%c0_7, %c0_8], %17 {strides = array<i32>} : memref<5x128xf32, #tpu.memory_space<vmem>>, vector<1x128xf32>,
    %c3 = arith.constant 3 : index
    %19 = memref.load %arg1[%c3] : memref<15xf32, #tpu.memory_space<smem>>
    %20 = vector.broadcast %19 : f32 to vector<1x128xf32>
    %21 = arith.mulf %0, %20 : vector<1x128xf32>
    %c4 = arith.constant 4 : index
    %22 = memref.load %arg1[%c4] : memref<15xf32, #tpu.memory_space<smem>>
    %23 = vector.broadcast %22 : f32 to vector<1x128xf32>
    %24 = arith.mulf %1, %23 : vector<1x128xf32>
    %25 = arith.addf %21, %24 : vector<1x128xf32>
    %c5 = arith.constant 5 : index
    %26 = memref.load %arg1[%c5] : memref<15xf32, #tpu.memory_space<smem>>
    %27 = vector.broadcast %26 : f32 to vector<1x128xf32>
    %28 = arith.mulf %2, %27 : vector<1x128xf32>
    %29 = arith.addf %25, %28 : vector<1x128xf32>
    %c1_9 = arith.constant 1 : index
    %30 = memref.load %arg2[%c1_9] : memref<5xf32, #tpu.memory_space<smem>>
    %31 = vector.broadcast %30 : f32 to vector<1x128xf32>
    %32 = arith.addf %29, %31 : vector<1x128xf32>
    %33 = math.tanh %32 : vector<1x128xf32>
    %c1_10 = arith.constant 1 : index
    %c0_11 = arith.constant 0 : index
    %34 = vector.load %arg4[%c1_10, %c0_11] : memref<5x128xf32, #tpu.memory_space<vmem>>, vector<1x128xf32>
    tpu.vector_store %arg4[%c1_10, %c0_11], %33 {strides = array<i32>} : memref<5x128xf32, #tpu.memory_space<vmem>>, vector<1x128xf32>,
    %c6 = arith.constant 6 : index
    %35 = memref.load %arg1[%c6] : memref<15xf32, #tpu.memory_space<smem>>
    %36 = vector.broadcast %35 : f32 to vector<1x128xf32>
    %37 = arith.mulf %0, %36 : vector<1x128xf32>
    %c7 = arith.constant 7 : index
    %38 = memref.load %arg1[%c7] : memref<15xf32, #tpu.memory_space<smem>>
    %39 = vector.broadcast %38 : f32 to vector<1x128xf32>
    %40 = arith.mulf %1, %39 : vector<1x128xf32>
    %41 = arith.addf %37, %40 : vector<1x128xf32>
    %c8 = arith.constant 8 : index
    %42 = memref.load %arg1[%c8] : memref<15xf32, #tpu.memory_space<smem>>
    %43 = vector.broadcast %42 : f32 to vector<1x128xf32>
    %44 = arith.mulf %2, %43 : vector<1x128xf32>
    %45 = arith.addf %41, %44 : vector<1x128xf32>
    %c2_12 = arith.constant 2 : index
    %46 = memref.load %arg2[%c2_12] : memref<5xf32, #tpu.memory_space<smem>>
    %47 = vector.broadcast %46 : f32 to vector<1x128xf32>
    %48 = arith.addf %45, %47 : vector<1x128xf32>
    %49 = math.tanh %48 : vector<1x128xf32>
    %c2_13 = arith.constant 2 : index
    %c0_14 = arith.constant 0 : index
    %50 = vector.load %arg4[%c2_13, %c0_14] : memref<5x128xf32, #tpu.memory_space<vmem>>, vector<1x128xf32>
    tpu.vector_store %arg4[%c2_13, %c0_14], %49 {strides = array<i32>} : memref<5x128xf32, #tpu.memory_space<vmem>>, vector<1x128xf32>,
    %c9 = arith.constant 9 : index
    %51 = memref.load %arg1[%c9] : memref<15xf32, #tpu.memory_space<smem>>
    %52 = vector.broadcast %51 : f32 to vector<1x128xf32>
    %53 = arith.mulf %0, %52 : vector<1x128xf32>
    %c10 = arith.constant 10 : index
    %54 = memref.load %arg1[%c10] : memref<15xf32, #tpu.memory_space<smem>>
    %55 = vector.broadcast %54 : f32 to vector<1x128xf32>
    %56 = arith.mulf %1, %55 : vector<1x128xf32>
    %57 = arith.addf %53, %56 : vector<1x128xf32>
    %c11 = arith.constant 11 : index
    %58 = memref.load %arg1[%c11] : memref<15xf32, #tpu.memory_space<smem>>
    %59 = vector.broadcast %58 : f32 to vector<1x128xf32>
    %60 = arith.mulf %2, %59 : vector<1x128xf32>
    %61 = arith.addf %57, %60 : vector<1x128xf32>
    %c3_15 = arith.constant 3 : index
    %62 = memref.load %arg2[%c3_15] : memref<5xf32, #tpu.memory_space<smem>>
    %63 = vector.broadcast %62 : f32 to vector<1x128xf32>
    %64 = arith.addf %61, %63 : vector<1x128xf32>
    %65 = math.tanh %64 : vector<1x128xf32>
    %c3_16 = arith.constant 3 : index
    %c0_17 = arith.constant 0 : index
    %66 = vector.load %arg4[%c3_16, %c0_17] : memref<5x128xf32, #tpu.memory_space<vmem>>, vector<1x128xf32>
    tpu.vector_store %arg4[%c3_16, %c0_17], %65 {strides = array<i32>} : memref<5x128xf32, #tpu.memory_space<vmem>>, vector<1x128xf32>,
    %c12 = arith.constant 12 : index
    %67 = memref.load %arg1[%c12] : memref<15xf32, #tpu.memory_space<smem>>
    %68 = vector.broadcast %67 : f32 to vector<1x128xf32>
    %69 = arith.mulf %0, %68 : vector<1x128xf32>
    %c13 = arith.constant 13 : index
    %70 = memref.load %arg1[%c13] : memref<15xf32, #tpu.memory_space<smem>>
    %71 = vector.broadcast %70 : f32 to vector<1x128xf32>
    %72 = arith.mulf %1, %71 : vector<1x128xf32>
    %73 = arith.addf %69, %72 : vector<1x128xf32>
    %c14 = arith.constant 14 : index
    %74 = memref.load %arg1[%c14] : memref<15xf32, #tpu.memory_space<smem>>
    %75 = vector.broadcast %74 : f32 to vector<1x128xf32>
    %76 = arith.mulf %2, %75 : vector<1x128xf32>
    %77 = arith.addf %73, %76 : vector<1x128xf32>
    %c4_18 = arith.constant 4 : index
    %78 = memref.load %arg2[%c4_18] : memref<5xf32, #tpu.memory_space<smem>>
    %79 = vector.broadcast %78 : f32 to vector<1x128xf32>
    %80 = arith.addf %77, %79 : vector<1x128xf32>
    %81 = math.tanh %80 : vector<1x128xf32>
    %c4_19 = arith.constant 4 : index
    %c0_20 = arith.constant 0 : index
    %82 = vector.load %arg4[%c4_19, %c0_20] : memref<5x128xf32, #tpu.memory_space<vmem>>, vector<1x128xf32>
    tpu.vector_store %arg4[%c4_19, %c0_20], %81 {strides = array<i32>} : memref<5x128xf32, #tpu.memory_space<vmem>>, vector<1x128xf32>,
    return
  }
  func.func @transform_0(%arg0: i32) -> i32 {
    %c0_i32 = arith.constant 0 : i32
    %c0_i32_0 = arith.constant 0 : i32
    return %c0_i32 : i32
  }
  func.func @transform_1(%arg0: i32) -> i32 {
    %c0_i32 = arith.constant 0 : i32
    %c0_i32_0 = arith.constant 0 : i32
    return %c0_i32 : i32
  }
  func.func @transform_2(%arg0: i32) -> (i32, i32) {
    %c0_i32 = arith.constant 0 : i32
    %c0_i32_0 = arith.constant 0 : i32
    return %c0_i32, %arg0 : i32, i32
  }
  func.func @transform_3(%arg0: i32) -> (i32, i32) {
    %c0_i32 = arith.constant 0 : i32
    %c0_i32_0 = arith.constant 0 : i32
    return %c0_i32, %arg0 : i32, i32
  }
}

</mosaic_0001>

<llo_original>
// kernel: tpu_custom_call.1
$region0: #{tpu_custom_call.1}
  #allocation0 [shape = 'u32[]', space=smem, size = 0x4, offset = 0x4, fixed_abs, tag = 'smem constant byte address 0x4 - core index']
  #allocation1 [shape = 'u32[144,128]{1,0:T(1,128)}', space=vmem, size = 0x12000, scoped, tag = 'internal scratch']
  %s0 = inlined_call_operand.hbm [shape: f32[15], index: 0, kind: input, shape index: {}]
  %s1 = inlined_call_operand.vmem [shape: f32[5], index: 1, kind: input, shape index: {}]
  %s2 = inlined_call_operand.hbm [shape: f32[3,128], index: 2, kind: input, shape index: {}]
  %s3 = inlined_call_operand.hbm [shape: f32[5,128], index: 3, kind: output, shape index: {}]
  %s4 = sld [smem:[#allocation0]]
  $region34: #{tpu_custom_call.1} parent=0
    _
  %s6 = ssub.s32 1, %s4
  %s7 = scalar_select 0, %s6, %s4
  $region1: #{tpu_custom_call.1} parent=0
    #allocation2 [shape = 'u8[512]{0}', space=smem, size = 0x200, scoped, tag = 'input window, operand 0, single buffered']
    #allocation3 [shape = 's32[1]{0}', space=sflag, size = 0x4, scoped, tag = 'scoped memory for tpu_custom_call.1']
    #allocation4 [shape = 's32[1]{0}', space=sflag, size = 0x4, scoped, tag = 'scoped memory for tpu_custom_call.1']
    #allocation5 [shape = 's32[1]{0}', space=sflag, size = 0x4, scoped, tag = 'scoped memory for tpu_custom_call.1']
    #allocation6 [shape = 's32[1]{0}', space=sflag, size = 0x4, scoped, tag = 'scoped memory for tpu_custom_call.1']
    #allocation7 [shape = 'u8[512]{0}', space=smem, size = 0x200, scoped, tag = 'input window, operand 1, single buffered']
    #allocation8 [shape = 'u8[2048]{0}', space=vmem, size = 0x800, scoped, tag = 'input window, operand 2, single buffered']
    #allocation9 [shape = 'u8[4096]{0}', space=vmem, size = 0x1000, scoped, tag = 'output window, operand 0, single buffered']
    %8 = vsyncpa [#allocation5], 0
    %9 = vsyncpa [#allocation6], 0
    %10 = vsyncpa [#allocation3], 0
    %11 = vsyncpa [#allocation4], 0
    // Predicated region
    $region2: #{tpu_custom_call.1} parent=1 // pred_check
      _
    $region3: #{tpu_custom_call.1} parent=1 // pred_check_branch
      %13 = sbr.rel (0) target = $region5
    $region4: #{tpu_custom_call.1} parent=1 // pred_region
      %s15 = ssub.s32 16, 16
      %16 = vsyncadd [#allocation5], %s15
      %19 = dma.hbm_to_smem %s0, 16, [#allocation2], [#allocation5]
    $region5: #{tpu_custom_call.1} parent=1 // pred_fallthru
      _
    // Predicated region
    $region6: #{tpu_custom_call.1} parent=1 // pred_check
      _
    $region7: #{tpu_custom_call.1} parent=1 // pred_check_branch
      %21 = sbr.rel (0) target = $region9
    $region8: #{tpu_custom_call.1} parent=1 // pred_region
      %s23 = ssub.s32 16, 16
      %24 = vsyncadd [#allocation6], %s23
      %s26 = sshll.u32 %s1, 4
      %s27 = int_to_ptr.vmem [resolvable:$true] %s26
      %29 = dma.vmem_to_smem %s27, 16, [#allocation7], [#allocation6]
    $region9: #{tpu_custom_call.1} parent=1 // pred_fallthru
      _
    // Predicated region
    $region10: #{tpu_custom_call.1} parent=1 // pred_check
      _
    $region11: #{tpu_custom_call.1} parent=1 // pred_check_branch
      %31 = sbr.rel (0) target = $region13
    $region12: #{tpu_custom_call.1} parent=1 // pred_region
      %s33 = ssub.s32 64, 64
      %34 = vsyncadd [#allocation3], %s33
      %s36 = sshll.u32 [#allocation8], 4
      %s37 = int_to_ptr.vmem [resolvable:$true] %s36
      %39 = dma.hbm_to_vmem [thread:$0]  %s2, 64, %s37, [#allocation3]
    $region13: #{tpu_custom_call.1} parent=1 // pred_fallthru
      _
    // Predicated region
    $region14: #{tpu_custom_call.1} parent=1 // pred_check
      _
    $region15: #{tpu_custom_call.1} parent=1 // pred_check_branch
      %41 = sbr.rel (0) target = $region17
    $region16: #{tpu_custom_call.1} parent=1 // pred_region
      %42 = dma.done [#allocation5], 16
    $region17: #{tpu_custom_call.1} parent=1 // pred_fallthru
      _
    // Predicated region
    $region18: #{tpu_custom_call.1} parent=1 // pred_check
      _
    $region19: #{tpu_custom_call.1} parent=1 // pred_check_branch
      %44 = sbr.rel (0) target = $region21
    $region20: #{tpu_custom_call.1} parent=1 // pred_region
      %45 = dma.done [#allocation6], 16
    $region21: #{tpu_custom_call.1} parent=1 // pred_fallthru
      _
    // Predicated region
    $region22: #{tpu_custom_call.1} parent=1 // pred_check
      _
    $region23: #{tpu_custom_call.1} parent=1 // pred_check_branch
      %47 = sbr.rel (0) target = $region25
    $region24: #{tpu_custom_call.1} parent=1 // pred_region
      %48 = dma.done [#allocation3], 64
    $region25: #{tpu_custom_call.1} parent=1 // pred_fallthru
      _
    %49 = sfence
    %v50 = vld [vmem:[#allocation8] sm:$0x1]
    %v51 = vld [vmem:[#allocation8 + $0x1] sm:$0x1]
    %v52 = vld [vmem:[#allocation8 + $0x2] sm:$0x1]
    %s53 = sld [smem:[#allocation2]]
    %v54 = vstv %s53
    %v55 = vmul.f32 %v50, %v54
    %s56 = sld [smem:[#allocation2 + $0x1]]
    %v57 = vstv %s56
    %v58 = vmul.f32 %v51, %v57
    %v59 = vadd.f32 %v55, %v58
    %s60 = sld [smem:[#allocation2 + $0x2]]
    %v61 = vstv %s60
    %v62 = vmul.f32 %v52, %v61
    %v63 = vadd.f32 %v59, %v62
    %s64 = sld [smem:[#allocation7]]
    %v65 = vstv %s64
    %v66 = vadd.f32 %v63, %v65
    %v67 = vtanh.pop %v66
    %68 = vst [vmem:[#allocation9] sm:$0x1] %v67
    %s69 = sld [smem:[#allocation2 + $0x3]]
    %v70 = vstv %s69
    %v71 = vmul.f32 %v50, %v70
    %s72 = sld [smem:[#allocation2 + $0x4]]
    %v73 = vstv %s72
    %v74 = vmul.f32 %v51, %v73
    %v75 = vadd.f32 %v71, %v74
    %s76 = sld [smem:[#allocation2 + $0x5]]
    %v77 = vstv %s76
    %v78 = vmul.f32 %v52, %v77
    %v79 = vadd.f32 %v75, %v78
    %s80 = sld [smem:[#allocation7 + $0x1]]
    %v81 = vstv %s80
    %v82 = vadd.f32 %v79, %v81
    %v83 = vtanh.pop %v82
    %84 = vst [vmem:[#allocation9 + $0x1] sm:$0x1] %v83
    %s85 = sld [smem:[#allocation2 + $0x6]]
    %v86 = vstv %s85
    %v87 = vmul.f32 %v50, %v86
    %s88 = sld [smem:[#allocation2 + $0x7]]
    %v89 = vstv %s88
    %v90 = vmul.f32 %v51, %v89
    %v91 = vadd.f32 %v87, %v90
    %s92 = sld [smem:[#allocation2 + $0x8]]
    %v93 = vstv %s92
    %v94 = vmul.f32 %v52, %v93
    %v95 = vadd.f32 %v91, %v94
    %s96 = sld [smem:[#allocation7 + $0x2]]
    %v97 = vstv %s96
    %v98 = vadd.f32 %v95, %v97
    %v99 = vtanh.pop %v98
    %100 = vst [vmem:[#allocation9 + $0x2] sm:$0x1] %v99
    %s101 = sld [smem:[#allocation2 + $0x9]]
    %v102 = vstv %s101
    %v103 = vmul.f32 %v50, %v102
    %s104 = sld [smem:[#allocation2 + $0xa]]
    %v105 = vstv %s104
    %v106 = vmul.f32 %v51, %v105
    %v107 = vadd.f32 %v103, %v106
    %s108 = sld [smem:[#allocation2 + $0xb]]
    %v109 = vstv %s108
    %v110 = vmul.f32 %v52, %v109
    %v111 = vadd.f32 %v107, %v110
    %s112 = sld [smem:[#allocation7 + $0x3]]
    %v113 = vstv %s112
    %v114 = vadd.f32 %v111, %v113
    %v115 = vtanh.pop %v114
    %116 = vst [vmem:[#allocation9 + $0x3] sm:$0x1] %v115
    %s117 = sld [smem:[#allocation2 + $0xc]]
    %v118 = vstv %s117
    %v119 = vmul.f32 %v50, %v118
    %s120 = sld [smem:[#allocation2 + $0xd]]
    %v121 = vstv %s120
    %v122 = vmul.f32 %v51, %v121
    %v123 = vadd.f32 %v119, %v122
    %s124 = sld [smem:[#allocation2 + $0xe]]
    %v125 = vstv %s124
    %v126 = vmul.f32 %v52, %v125
    %v127 = vadd.f32 %v123, %v126
    %s128 = sld [smem:[#allocation7 + $0x4]]
    %v129 = vstv %s128
    %v130 = vadd.f32 %v127, %v129
    %v131 = vtanh.pop %v130
    %132 = vst [vmem:[#allocation9 + $0x4] sm:$0x1] %v131
    // Predicated region
    $region26: #{tpu_custom_call.1} parent=1 // pred_check
      _
    $region27: #{tpu_custom_call.1} parent=1 // pred_check_branch
      %134 = sbr.rel (0) target = $region29
    $region28: #{tpu_custom_call.1} parent=1 // pred_region
      %s136 = ssub.s32 128, 128
      %137 = vsyncadd [#allocation4], %s136
      %s139 = sshll.u32 [#allocation9], 4
      %s140 = int_to_ptr.vmem [resolvable:$true] %s139
      %142 = dma.vmem_to_hbm [thread:$0]  %s140, 128, %s3, [#allocation4]
    $region29: #{tpu_custom_call.1} parent=1 // pred_fallthru
      _
    // Predicated region
    $region30: #{tpu_custom_call.1} parent=1 // pred_check
      _
    $region31: #{tpu_custom_call.1} parent=1 // pred_check_branch
      %144 = sbr.rel (0) target = $region33
    $region32: #{tpu_custom_call.1} parent=1 // pred_region
      %145 = dma.done [#allocation4], 128
    $region33: #{tpu_custom_call.1} parent=1 // pred_fallthru
      _
    %146 = vsyncpa [#allocation3], 1
    %147 = vsyncpa [#allocation4], 1
    %148 = vsyncpa [#allocation5], 1
    %149 = vsyncpa [#allocation6], 1

</llo_original>
